<compile_context>
chip_gen: v6e
topology: v6e:2x2x1
jax: 0.10.0
libtpu: 0.0.40
codegen_flags: <defaults>
</compile_context>

<pallas_src>
import jax
import jax.numpy as jnp
from jax import lax
from jax.experimental import pallas as pl
from jax.experimental.pallas import tpu as pltpu

LANE = 128
SUBLANE = 8


def _round_up(n, m):
    return ((n + m - 1) // m) * m


def _rnn_scan_kernel(xproj_ref, h0_ref, w_hh_ref, hs_ref, h_scratch):
    """Sequential recurrence: h_{t+1} = tanh(xproj_t + h_t @ W_hh^T).

    NOTE (correctness): the resident h_scratch carry requires batch-outer /
    time-inner grid iteration with the time axis marked "arbitrary"; the
    carry is re-initialized from h0 whenever the time-chunk index is 0 (i.e.
    whenever the batch tile changes).  Do NOT reorder the grid axes.
    """
    t_chunk_idx = pl.program_id(1)

    @pl.when(t_chunk_idx == 0)
    def _():
        h_scratch[...] = h0_ref[...]

    n_steps = hs_ref.shape[0]                         # static T_CHUNK

    def step(i, carry):
        h_op = h_scratch[...].astype(w_hh_ref.dtype)  # bf16 MXU operand
        pre = xproj_ref[i] + jnp.dot(h_op, w_hh_ref[...],
                                     preferred_element_type=jnp.float32)
        h_new = jnp.tanh(pre)                         # f32 (VPU/EUP)
        h_scratch[...] = h_new
        hs_ref[i] = h_new
        return carry

    # Unrolled: gives the LLO scheduler visibility across the short fixed loop.
    lax.fori_loop(0, n_steps, step, 0, unroll=True)


def prepare_params(params, compute_dtype=jnp.bfloat16):
    """One-time parameter prep: transpose, fuse biases, pad hidden dim, cast."""
    L, I = params["W_ih"].shape
    O, _ = params["W_ro"].shape
    Lp = _round_up(L, LANE)

    # Recurrent weight: bf16 MXU operand inside the kernel, lane-padded on both
    # dims.  Zero padding is semantically inert (tanh(0)=0, zero rows/cols).
    w_hh_t = jnp.zeros((Lp, Lp), compute_dtype).at[:L, :L].set(
        params["W_hh"].T.astype(compute_dtype))

    # Input-projection / readout weights stay f32 and are applied OUTSIDE the
    # scan as full-size batched matmuls; only the hidden dim is padded.
    w_ih_t = jnp.zeros((I, Lp), jnp.float32).at[:, :L].set(
        params["W_ih"].T.astype(jnp.float32))
    b_fused = jnp.zeros((Lp,), jnp.float32).at[:L].set(
        (params["b_ih"] + params["b_hh"]).astype(jnp.float32))
    w_ro_t = params["W_ro"].T.astype(jnp.float32)          # (L, O)
    b_ro = params["b_ro"].astype(jnp.float32)

    return {"w_hh_t": w_hh_t, "w_ih_t": w_ih_t, "b_fused": b_fused,
            "w_ro_t": w_ro_t, "b_ro": b_ro, "dims": (I, L, O)}


def _vmem_capacity_bytes():
    """Per-core VMEM capacity; conservative fallback = v7x's 64 MiB."""
    try:
        info = pltpu.get_tpu_info()
        cap = int(getattr(info, "vmem_capacity_bytes", 0) or 0)
        if cap > 0:
            return cap
    except Exception:
        pass
    return 64 * 1024 * 1024


def vanilla_rnn_scan(xs, h0, prepared, *, block_b=None, t_chunk=None):
    """Run T fused RNN steps (recurrence in Pallas, projections batched).

    xs: (T, B, input_size) f32
    h0: (B, latent_size) f32 or None (-> zeros, matching hidden=None)
    returns (outputs (T, B, output_size) f32, h_final (B, latent_size) f32)
    """
    I, L, O = prepared["dims"]
    T, B, _ = xs.shape
    Lp = prepared["w_hh_t"].shape[0]

    if h0 is None:
        h0 = jnp.zeros((B, L), jnp.float32)

    # ---- batch tile: MXU-row sized when B is large, 8-aligned when tiny -----
    if block_b is None:
        if B >= LANE:
            block_b = min(_round_up(B, LANE), 256)
        else:
            block_b = _round_up(B, SUBLANE)
    Bp = _round_up(B, block_b)
    nb = Bp // block_b

    # ---- time chunk: amortize per-grid-step overhead, bounded by VMEM -------
    if t_chunk is None:
        per_step = 2 * block_b * Lp * 4               # xproj + hs tile / step
        t_chunk = max(1, min(T, (8 << 20) // max(per_step, 1), 32))
    Tp = _round_up(T, t_chunk)
    n_chunks = Tp // t_chunk

    # ---- input projection hoisted out of the sequential loop ----------------
    # One batched (T*B, I) @ (I, Lp) matmul with the fused bias; hidden dim is
    # already lane-padded via w_ih_t so no extra feature padding of xs.
    xproj = jnp.einsum("tbi,il->tbl", xs.astype(jnp.float32),
                       prepared["w_ih_t"]) + prepared["b_fused"]
    if (Tp, Bp) != (T, B):                            # pad time/batch only if needed
        xproj = jnp.zeros((Tp, Bp, Lp), jnp.float32).at[:T, :B, :].set(xproj)

    if h0.shape != (Bp, Lp):
        h0_p = jnp.zeros((Bp, Lp), jnp.float32).at[:B, :L].set(
            h0.astype(jnp.float32))
    else:
        h0_p = h0.astype(jnp.float32)

    # ---- scoped-VMEM budget: resident W_hh + streamed activation tiles ------
    resident = (2 * Lp * Lp * prepared["w_hh_t"].dtype.itemsize   # W_hh (buffered)
                + 2 * block_b * Lp * 4                             # h0 (double-buf)
                + block_b * Lp * 4)                                # h_scratch
    streamed = 2 * 2 * t_chunk * block_b * Lp * 4                  # xproj + hs, 2x buf
    cap = _vmem_capacity_bytes()
    vmem_limit = min(max(int(1.5 * (resident + streamed)), 32 << 20),
                     int(0.78 * cap))

    hs_p = pl.pallas_call(
        _rnn_scan_kernel,
        out_shape=jax.ShapeDtypeStruct((Tp, Bp, Lp), jnp.float32),
        grid_spec=pltpu.PrefetchScalarGridSpec(
            num_scalar_prefetch=0,
            grid=(nb, n_chunks),                       # batch outer, time inner
            in_specs=[
                pl.BlockSpec((t_chunk, block_b, Lp), lambda b, t: (t, b, 0)),  # xproj
                pl.BlockSpec((block_b, Lp), lambda b, t: (b, 0)),              # h0
                pl.BlockSpec((Lp, Lp), lambda b, t: (0, 0)),                   # W_hh^T
            ],
            out_specs=pl.BlockSpec((t_chunk, block_b, Lp),
                                   lambda b, t: (t, b, 0)),                    # hs
            scratch_shapes=[pltpu.VMEM((block_b, Lp), jnp.float32)],           # carry
        ),
        compiler_params=pltpu.CompilerParams(
            dimension_semantics=("parallel", "arbitrary"),
            vmem_limit_bytes=vmem_limit,
        ),
    )(xproj, h0_p, prepared["w_hh_t"])

    hs = hs_p[:T, :B, :L]                              # strip time/batch/lane padding
    h_final = hs[T - 1]

    # ---- readout deferred out of the sequential loop: one batched matmul ----
    outs = jnp.einsum("tbl,lo->tbo", hs, prepared["w_ro_t"]) + prepared["b_ro"]
    return outs, h_final


def vanilla_rnn_forward(x, h, prepared):
    """Single-step API matching the PyTorch module's forward(inputs, hidden)."""
    outs, h_new = vanilla_rnn_scan(x[None], h, prepared)
    return outs[0], h_new


def init_params(key, input_size, latent_size, output_size):
    """Deterministic init matching PyTorch default shapes/init ranges."""
    ks = jax.random.split(key, 6)
    k_cell = 1.0 / jnp.sqrt(latent_size)   # RNNCell: U(-1/sqrt(H), 1/sqrt(H))
    k_ro = 1.0 / jnp.sqrt(latent_size)     # Linear: U(-1/sqrt(in), 1/sqrt(in))
    u = lambda k, shape, s: jax.random.uniform(k, shape, jnp.float32, -s, s)
    return {
        "W_ih": u(ks[0], (latent_size, input_size), k_cell),
        "b_ih": u(ks[1], (latent_size,), k_cell),
        "W_hh": u(ks[2], (latent_size, latent_size), k_cell),
        "b_hh": u(ks[3], (latent_size,), k_cell),
        "W_ro": u(ks[4], (output_size, latent_size), k_ro),
        "b_ro": u(ks[5], (output_size,), k_ro),
    }


def _ref_scan(params, xs, h0):
    def ref_step(h, x):
        h = jnp.tanh(x @ params["W_ih"].T + params["b_ih"]
                     + h @ params["W_hh"].T + params["b_hh"])
        return h, h @ params["W_ro"].T + params["b_ro"]
    h_T, outs = jax.lax.scan(ref_step, h0, xs)
    return outs, h_T


if __name__ == "__main__":
    key = jax.random.PRNGKey(0)

    # ---- small case (matches the original demo shapes) ----------------------
    B, I, L, O, T = 8, 8, 32, 16, 8
    k_p, k_x, k_h, k2 = jax.random.split(key, 4)
    params = init_params(k_p, I, L, O)
    prepared = prepare_params(params)
    xs = jax.random.normal(k_x, (T, B, I), jnp.float32)
    h0 = jax.random.normal(k_h, (B, L), jnp.float32)

    outs, h_T = vanilla_rnn_scan(xs, h0, prepared)
    jax.block_until_ready((outs, h_T))
    outs_ref, h_ref_T = _ref_scan(params, xs, h0)

    assert outs.shape == (T, B, O) and h_T.shape == (B, L)
    # bf16 recurrent MXU operand + f32 accumulation -> ~1e-2-level deviation.
    assert jnp.allclose(outs, outs_ref, atol=2e-2), "output mismatch"
    assert jnp.allclose(h_T, h_ref_T, atol=2e-2), "hidden mismatch"

    # Single-step API (the module's forward(inputs, hidden) -> (output, hidden)).
    out1, h1 = vanilla_rnn_forward(xs[0], h0, prepared)
    jax.block_until_ready((out1, h1))
    h1_ref = jnp.tanh(xs[0] @ params["W_ih"].T + params["b_ih"]
                      + h0 @ params["W_hh"].T + params["b_hh"])
    out1_ref = h1_ref @ params["W_ro"].T + params["b_ro"]
    assert jnp.allclose(out1, out1_ref, atol=2e-2), "single-step output mismatch"
    assert jnp.allclose(h1, h1_ref, atol=2e-2), "single-step hidden mismatch"

    # ---- larger case: exercises 128-multiple block_b, batch padding, --------
    # ---- multi-chunk time axis (carry across grid steps) and time padding. --
    B2, I2, L2, O2, T2 = 160, 12, 100, 24, 10
    kp2, kx2, kh2 = jax.random.split(k2, 3)
    params2 = init_params(kp2, I2, L2, O2)
    prepared2 = prepare_params(params2)
    xs2 = jax.random.normal(kx2, (T2, B2, I2), jnp.float32)
    h02 = jax.random.normal(kh2, (B2, L2), jnp.float32)

    outs2, h_T2 = vanilla_rnn_scan(xs2, h02, prepared2, t_chunk=4)
    jax.block_until_ready((outs2, h_T2))
    outs2_ref, h_T2_ref = _ref_scan(params2, xs2, h02)
    assert outs2.shape == (T2, B2, O2) and h_T2.shape == (B2, L2)
    assert jnp.allclose(outs2, outs2_ref, atol=3e-2), "large output mismatch"
    assert jnp.allclose(h_T2, h_T2_ref, atol=3e-2), "large hidden mismatch"

    print("KERNEL_OK")
</pallas_src>

<mosaic_0001>
module attributes {stable_mosaic.version = 11 : i64} {
  func.func @_rnn_scan_kernel(%arg0: i32, %arg1: i32, %arg2: memref<8x8x128xf32, #tpu.memory_space<vmem>>, %arg3: memref<8x128xf32, #tpu.memory_space<vmem>>, %arg4: memref<128x128xbf16, #tpu.memory_space<vmem>>, %arg5: memref<8x8x128xf32, #tpu.memory_space<vmem>>, %arg6: memref<8x128xf32, #tpu.memory_space<vmem>>) attributes {dimension_semantics = [#tpu.dimension_semantics<parallel>, #tpu.dimension_semantics<arbitrary>], iteration_bounds = array<i64: 1, 1>, scalar_prefetch = 0 : i64, scratch_operands = 1 : i64, tpu.core_type = #tpu.core_type<tc>, window_params = [{transform_indices = @transform_0, window_bounds = array<i64: 8, 8, 128>}, {transform_indices = @transform_1, window_bounds = array<i64: 8, 128>}, {pipeline_mode = #tpu.pipeline_mode<synchronous>, transform_indices = @transform_2, window_bounds = array<i64: 128, 128>}, {transform_indices = @transform_3, window_bounds = array<i64: 8, 8, 128>}]} {
    %c0_i32 = arith.constant 0 : i32
    %0 = arith.cmpi eq, %arg1, %c0_i32 : i32
    %1 = arith.extui %0 : i1 to i32
    %c0_i32_0 = arith.constant 0 : i32
    %2 = arith.cmpi ne, %1, %c0_i32_0 : i32
    scf.if %2 {
      %c0_88 = arith.constant 0 : index
      %c0_89 = arith.constant 0 : index
      %115 = vector.load %arg3[%c0_88, %c0_89] : memref<8x128xf32, #tpu.memory_space<vmem>>, vector<8x128xf32>
      %c0_90 = arith.constant 0 : index
      %c0_91 = arith.constant 0 : index
      %116 = vector.load %arg6[%c0_90, %c0_91] : memref<8x128xf32, #tpu.memory_space<vmem>>, vector<8x128xf32>
      tpu.vector_store %arg6[%c0_90, %c0_91], %115 {strides = array<i32>} : memref<8x128xf32, #tpu.memory_space<vmem>>, vector<8x128xf32>,
    } else {
    }
    %c0_i32_1 = arith.constant 0 : i32
    %c0 = arith.constant 0 : index
    %c0_2 = arith.constant 0 : index
    %3 = vector.load %arg6[%c0, %c0_2] : memref<8x128xf32, #tpu.memory_space<vmem>>, vector<8x128xf32>
    %4 = arith.truncf %3 : vector<8x128xf32> to vector<8x128xbf16>
    %5 = arith.index_cast %c0_i32_1 : i32 to index
    %c0_3 = arith.constant 0 : index
    %c0_4 = arith.constant 0 : index
    %6 = vector.load %arg2[%5, %c0_3, %c0_4] : memref<8x8x128xf32, #tpu.memory_space<vmem>>, vector<1x8x128xf32>
    %7 = vector.shape_cast %6 : vector<1x8x128xf32> to vector<8x128xf32>
    %c0_5 = arith.constant 0 : index
    %c0_6 = arith.constant 0 : index
    %8 = vector.load %arg4[%c0_5, %c0_6] : memref<128x128xbf16, #tpu.memory_space<vmem>>, vector<128x128xbf16>
    %cst = arith.constant dense<0.000000e+00> : vector<8x128xf32>
    %9 = tpu.matmul %4, %8, %cst {dimension_numbers = #tpu.dot_dimension_numbers<[1], [0], [0], [1], [0, 0, 1, 1], [], []>} : vector<8x128xbf16>, vector<128x128xbf16>, vector<8x128xf32> -> vector<8x128xf32>
    %10 = arith.addf %7, %9 : vector<8x128xf32>
    %11 = math.tanh %10 : vector<8x128xf32>
    %c0_7 = arith.constant 0 : index
    %c0_8 = arith.constant 0 : index
    %12 = vector.load %arg6[%c0_7, %c0_8] : memref<8x128xf32, #tpu.memory_space<vmem>>, vector<8x128xf32>
    tpu.vector_store %arg6[%c0_7, %c0_8], %11 {strides = array<i32>} : memref<8x128xf32, #tpu.memory_space<vmem>>, vector<8x128xf32>,
    %13 = arith.index_cast %c0_i32_1 : i32 to index
    %c0_9 = arith.constant 0 : index
    %c0_10 = arith.constant 0 : index
    %14 = vector.load %arg5[%13, %c0_9, %c0_10] : memref<8x8x128xf32, #tpu.memory_space<vmem>>, vector<1x8x128xf32>
    %15 = vector.shape_cast %14 : vector<1x8x128xf32> to vector<8x128xf32>
    %16 = vector.shape_cast %11 : vector<8x128xf32> to vector<1x8x128xf32>
    tpu.vector_store %arg5[%13, %c0_9, %c0_10], %16 {strides = array<i32>} : memref<8x8x128xf32, #tpu.memory_space<vmem>>, vector<1x8x128xf32>,
    %c1_i32 = arith.constant 1 : i32
    %c0_11 = arith.constant 0 : index
    %c0_12 = arith.constant 0 : index
    %17 = vector.load %arg6[%c0_11, %c0_12] : memref<8x128xf32, #tpu.memory_space<vmem>>, vector<8x128xf32>
    %18 = arith.truncf %17 : vector<8x128xf32> to vector<8x128xbf16>
    %19 = arith.index_cast %c1_i32 : i32 to index
    %c0_13 = arith.constant 0 : index
    %c0_14 = arith.constant 0 : index
    %20 = vector.load %arg2[%19, %c0_13, %c0_14] : memref<8x8x128xf32, #tpu.memory_space<vmem>>, vector<1x8x128xf32>
    %21 = vector.shape_cast %20 : vector<1x8x128xf32> to vector<8x128xf32>
    %c0_15 = arith.constant 0 : index
    %c0_16 = arith.constant 0 : index
    %22 = vector.load %arg4[%c0_15, %c0_16] : memref<128x128xbf16, #tpu.memory_space<vmem>>, vector<128x128xbf16>
    %cst_17 = arith.constant dense<0.000000e+00> : vector<8x128xf32>
    %23 = tpu.matmul %18, %22, %cst_17 {dimension_numbers = #tpu.dot_dimension_numbers<[1], [0], [0], [1], [0, 0, 1, 1], [], []>} : vector<8x128xbf16>, vector<128x128xbf16>, vector<8x128xf32> -> vector<8x128xf32>
    %24 = arith.addf %21, %23 : vector<8x128xf32>
    %25 = math.tanh %24 : vector<8x128xf32>
    %c0_18 = arith.constant 0 : index
    %c0_19 = arith.constant 0 : index
    %26 = vector.load %arg6[%c0_18, %c0_19] : memref<8x128xf32, #tpu.memory_space<vmem>>, vector<8x128xf32>
    tpu.vector_store %arg6[%c0_18, %c0_19], %25 {strides = array<i32>} : memref<8x128xf32, #tpu.memory_space<vmem>>, vector<8x128xf32>,
    %27 = arith.index_cast %c1_i32 : i32 to index
    %c0_20 = arith.constant 0 : index
    %c0_21 = arith.constant 0 : index
    %28 = vector.load %arg5[%27, %c0_20, %c0_21] : memref<8x8x128xf32, #tpu.memory_space<vmem>>, vector<1x8x128xf32>
    %29 = vector.shape_cast %28 : vector<1x8x128xf32> to vector<8x128xf32>
    %30 = vector.shape_cast %25 : vector<8x128xf32> to vector<1x8x128xf32>
    tpu.vector_store %arg5[%27, %c0_20, %c0_21], %30 {strides = array<i32>} : memref<8x8x128xf32, #tpu.memory_space<vmem>>, vector<1x8x128xf32>,
    %c2_i32 = arith.constant 2 : i32
    %c0_22 = arith.constant 0 : index
    %c0_23 = arith.constant 0 : index
    %31 = vector.load %arg6[%c0_22, %c0_23] : memref<8x128xf32, #tpu.memory_space<vmem>>, vector<8x128xf32>
    %32 = arith.truncf %31 : vector<8x128xf32> to vector<8x128xbf16>
    %33 = arith.index_cast %c2_i32 : i32 to index
    %c0_24 = arith.constant 0 : index
    %c0_25 = arith.constant 0 : index
    %34 = vector.load %arg2[%33, %c0_24, %c0_25] : memref<8x8x128xf32, #tpu.memory_space<vmem>>, vector<1x8x128xf32>
    %35 = vector.shape_cast %34 : vector<1x8x128xf32> to vector<8x128xf32>
    %c0_26 = arith.constant 0 : index
    %c0_27 = arith.constant 0 : index
    %36 = vector.load %arg4[%c0_26, %c0_27] : memref<128x128xbf16, #tpu.memory_space<vmem>>, vector<128x128xbf16>
    %cst_28 = arith.constant dense<0.000000e+00> : vector<8x128xf32>
    %37 = tpu.matmul %32, %36, %cst_28 {dimension_numbers = #tpu.dot_dimension_numbers<[1], [0], [0], [1], [0, 0, 1, 1], [], []>} : vector<8x128xbf16>, vector<128x128xbf16>, vector<8x128xf32> -> vector<8x128xf32>
    %38 = arith.addf %35, %37 : vector<8x128xf32>
    %39 = math.tanh %38 : vector<8x128xf32>
    %c0_29 = arith.constant 0 : index
    %c0_30 = arith.constant 0 : index
    %40 = vector.load %arg6[%c0_29, %c0_30] : memref<8x128xf32, #tpu.memory_space<vmem>>, vector<8x128xf32>
    tpu.vector_store %arg6[%c0_29, %c0_30], %39 {strides = array<i32>} : memref<8x128xf32, #tpu.memory_space<vmem>>, vector<8x128xf32>,
    %41 = arith.index_cast %c2_i32 : i32 to index
    %c0_31 = arith.constant 0 : index
    %c0_32 = arith.constant 0 : index
    %42 = vector.load %arg5[%41, %c0_31, %c0_32] : memref<8x8x128xf32, #tpu.memory_space<vmem>>, vector<1x8x128xf32>
    %43 = vector.shape_cast %42 : vector<1x8x128xf32> to vector<8x128xf32>
    %44 = vector.shape_cast %39 : vector<8x128xf32> to vector<1x8x128xf32>
    tpu.vector_store %arg5[%41, %c0_31, %c0_32], %44 {strides = array<i32>} : memref<8x8x128xf32, #tpu.memory_space<vmem>>, vector<1x8x128xf32>,
    %c3_i32 = arith.constant 3 : i32
    %c0_33 = arith.constant 0 : index
    %c0_34 = arith.constant 0 : index
    %45 = vector.load %arg6[%c0_33, %c0_34] : memref<8x128xf32, #tpu.memory_space<vmem>>, vector<8x128xf32>
    %46 = arith.truncf %45 : vector<8x128xf32> to vector<8x128xbf16>
    %47 = arith.index_cast %c3_i32 : i32 to index
    %c0_35 = arith.constant 0 : index
    %c0_36 = arith.constant 0 : index
    %48 = vector.load %arg2[%47, %c0_35, %c0_36] : memref<8x8x128xf32, #tpu.memory_space<vmem>>, vector<1x8x128xf32>
    %49 = vector.shape_cast %48 : vector<1x8x128xf32> to vector<8x128xf32>
    %c0_37 = arith.constant 0 : index
    %c0_38 = arith.constant 0 : index
    %50 = vector.load %arg4[%c0_37, %c0_38] : memref<128x128xbf16, #tpu.memory_space<vmem>>, vector<128x128xbf16>
    %cst_39 = arith.constant dense<0.000000e+00> : vector<8x128xf32>
    %51 = tpu.matmul %46, %50, %cst_39 {dimension_numbers = #tpu.dot_dimension_numbers<[1], [0], [0], [1], [0, 0, 1, 1], [], []>} : vector<8x128xbf16>, vector<128x128xbf16>, vector<8x128xf32> -> vector<8x128xf32>
    %52 = arith.addf %49, %51 : vector<8x128xf32>
    %53 = math.tanh %52 : vector<8x128xf32>
    %c0_40 = arith.constant 0 : index
    %c0_41 = arith.constant 0 : index
    %54 = vector.load %arg6[%c0_40, %c0_41] : memref<8x128xf32, #tpu.memory_space<vmem>>, vector<8x128xf32>
    tpu.vector_store %arg6[%c0_40, %c0_41], %53 {strides = array<i32>} : memref<8x128xf32, #tpu.memory_space<vmem>>, vector<8x128xf32>,
    %55 = arith.index_cast %c3_i32 : i32 to index
    %c0_42 = arith.constant 0 : index
    %c0_43 = arith.constant 0 : index
    %56 = vector.load %arg5[%55, %c0_42, %c0_43] : memref<8x8x128xf32, #tpu.memory_space<vmem>>, vector<1x8x128xf32>
    %57 = vector.shape_cast %56 : vector<1x8x128xf32> to vector<8x128xf32>
    %58 = vector.shape_cast %53 : vector<8x128xf32> to vector<1x8x128xf32>
    tpu.vector_store %arg5[%55, %c0_42, %c0_43], %58 {strides = array<i32>} : memref<8x8x128xf32, #tpu.memory_space<vmem>>, vector<1x8x128xf32>,
    %c4_i32 = arith.constant 4 : i32
    %c0_44 = arith.constant 0 : index
    %c0_45 = arith.constant 0 : index
    %59 = vector.load %arg6[%c0_44, %c0_45] : memref<8x128xf32, #tpu.memory_space<vmem>>, vector<8x128xf32>
    %60 = arith.truncf %59 : vector<8x128xf32> to vector<8x128xbf16>
    %61 = arith.index_cast %c4_i32 : i32 to index
    %c0_46 = arith.constant 0 : index
    %c0_47 = arith.constant 0 : index
    %62 = vector.load %arg2[%61, %c0_46, %c0_47] : memref<8x8x128xf32, #tpu.memory_space<vmem>>, vector<1x8x128xf32>
    %63 = vector.shape_cast %62 : vector<1x8x128xf32> to vector<8x128xf32>
    %c0_48 = arith.constant 0 : index
    %c0_49 = arith.constant 0 : index
    %64 = vector.load %arg4[%c0_48, %c0_49] : memref<128x128xbf16, #tpu.memory_space<vmem>>, vector<128x128xbf16>
    %cst_50 = arith.constant dense<0.000000e+00> : vector<8x128xf32>
    %65 = tpu.matmul %60, %64, %cst_50 {dimension_numbers = #tpu.dot_dimension_numbers<[1], [0], [0], [1], [0, 0, 1, 1], [], []>} : vector<8x128xbf16>, vector<128x128xbf16>, vector<8x128xf32> -> vector<8x128xf32>
    %66 = arith.addf %63, %65 : vector<8x128xf32>
    %67 = math.tanh %66 : vector<8x128xf32>
    %c0_51 = arith.constant 0 : index
    %c0_52 = arith.constant 0 : index
    %68 = vector.load %arg6[%c0_51, %c0_52] : memref<8x128xf32, #tpu.memory_space<vmem>>, vector<8x128xf32>
    tpu.vector_store %arg6[%c0_51, %c0_52], %67 {strides = array<i32>} : memref<8x128xf32, #tpu.memory_space<vmem>>, vector<8x128xf32>,
    %69 = arith.index_cast %c4_i32 : i32 to index
    %c0_53 = arith.constant 0 : index
    %c0_54 = arith.constant 0 : index
    %70 = vector.load %arg5[%69, %c0_53, %c0_54] : memref<8x8x128xf32, #tpu.memory_space<vmem>>, vector<1x8x128xf32>
    %71 = vector.shape_cast %70 : vector<1x8x128xf32> to vector<8x128xf32>
    %72 = vector.shape_cast %67 : vector<8x128xf32> to vector<1x8x128xf32>
    tpu.vector_store %arg5[%69, %c0_53, %c0_54], %72 {strides = array<i32>} : memref<8x8x128xf32, #tpu.memory_space<vmem>>, vector<1x8x128xf32>,
    %c5_i32 = arith.constant 5 : i32
    %c0_55 = arith.constant 0 : index
    %c0_56 = arith.constant 0 : index
    %73 = vector.load %arg6[%c0_55, %c0_56] : memref<8x128xf32, #tpu.memory_space<vmem>>, vector<8x128xf32>
    %74 = arith.truncf %73 : vector<8x128xf32> to vector<8x128xbf16>
    %75 = arith.index_cast %c5_i32 : i32 to index
    %c0_57 = arith.constant 0 : index
    %c0_58 = arith.constant 0 : index
    %76 = vector.load %arg2[%75, %c0_57, %c0_58] : memref<8x8x128xf32, #tpu.memory_space<vmem>>, vector<1x8x128xf32>
    %77 = vector.shape_cast %76 : vector<1x8x128xf32> to vector<8x128xf32>
    %c0_59 = arith.constant 0 : index
    %c0_60 = arith.constant 0 : index
    %78 = vector.load %arg4[%c0_59, %c0_60] : memref<128x128xbf16, #tpu.memory_space<vmem>>, vector<128x128xbf16>
    %cst_61 = arith.constant dense<0.000000e+00> : vector<8x128xf32>
    %79 = tpu.matmul %74, %78, %cst_61 {dimension_numbers = #tpu.dot_dimension_numbers<[1], [0], [0], [1], [0, 0, 1, 1], [], []>} : vector<8x128xbf16>, vector<128x128xbf16>, vector<8x128xf32> -> vector<8x128xf32>
    %80 = arith.addf %77, %79 : vector<8x128xf32>
    %81 = math.tanh %80 : vector<8x128xf32>
    %c0_62 = arith.constant 0 : index
    %c0_63 = arith.constant 0 : index
    %82 = vector.load %arg6[%c0_62, %c0_63] : memref<8x128xf32, #tpu.memory_space<vmem>>, vector<8x128xf32>
    tpu.vector_store %arg6[%c0_62, %c0_63], %81 {strides = array<i32>} : memref<8x128xf32, #tpu.memory_space<vmem>>, vector<8x128xf32>,
    %83 = arith.index_cast %c5_i32 : i32 to index
    %c0_64 = arith.constant 0 : index
    %c0_65 = arith.constant 0 : index
    %84 = vector.load %arg5[%83, %c0_64, %c0_65] : memref<8x8x128xf32, #tpu.memory_space<vmem>>, vector<1x8x128xf32>
    %85 = vector.shape_cast %84 : vector<1x8x128xf32> to vector<8x128xf32>
    %86 = vector.shape_cast %81 : vector<8x128xf32> to vector<1x8x128xf32>
    tpu.vector_store %arg5[%83, %c0_64, %c0_65], %86 {strides = array<i32>} : memref<8x8x128xf32, #tpu.memory_space<vmem>>, vector<1x8x128xf32>,
    %c6_i32 = arith.constant 6 : i32
    %c0_66 = arith.constant 0 : index
    %c0_67 = arith.constant 0 : index
    %87 = vector.load %arg6[%c0_66, %c0_67] : memref<8x128xf32, #tpu.memory_space<vmem>>, vector<8x128xf32>
    %88 = arith.truncf %87 : vector<8x128xf32> to vector<8x128xbf16>
    %89 = arith.index_cast %c6_i32 : i32 to index
    %c0_68 = arith.constant 0 : index
    %c0_69 = arith.constant 0 : index
    %90 = vector.load %arg2[%89, %c0_68, %c0_69] : memref<8x8x128xf32, #tpu.memory_space<vmem>>, vector<1x8x128xf32>
    %91 = vector.shape_cast %90 : vector<1x8x128xf32> to vector<8x128xf32>
    %c0_70 = arith.constant 0 : index
    %c0_71 = arith.constant 0 : index
    %92 = vector.load %arg4[%c0_70, %c0_71] : memref<128x128xbf16, #tpu.memory_space<vmem>>, vector<128x128xbf16>
    %cst_72 = arith.constant dense<0.000000e+00> : vector<8x128xf32>
    %93 = tpu.matmul %88, %92, %cst_72 {dimension_numbers = #tpu.dot_dimension_numbers<[1], [0], [0], [1], [0, 0, 1, 1], [], []>} : vector<8x128xbf16>, vector<128x128xbf16>, vector<8x128xf32> -> vector<8x128xf32>
    %94 = arith.addf %91, %93 : vector<8x128xf32>
    %95 = math.tanh %94 : vector<8x128xf32>
    %c0_73 = arith.constant 0 : index
    %c0_74 = arith.constant 0 : index
    %96 = vector.load %arg6[%c0_73, %c0_74] : memref<8x128xf32, #tpu.memory_space<vmem>>, vector<8x128xf32>
    tpu.vector_store %arg6[%c0_73, %c0_74], %95 {strides = array<i32>} : memref<8x128xf32, #tpu.memory_space<vmem>>, vector<8x128xf32>,
    %97 = arith.index_cast %c6_i32 : i32 to index
    %c0_75 = arith.constant 0 : index
    %c0_76 = arith.constant 0 : index
    %98 = vector.load %arg5[%97, %c0_75, %c0_76] : memref<8x8x128xf32, #tpu.memory_space<vmem>>, vector<1x8x128xf32>
    %99 = vector.shape_cast %98 : vector<1x8x128xf32> to vector<8x128xf32>
    %100 = vector.shape_cast %95 : vector<8x128xf32> to vector<1x8x128xf32>
    tpu.vector_store %arg5[%97, %c0_75, %c0_76], %100 {strides = array<i32>} : memref<8x8x128xf32, #tpu.memory_space<vmem>>, vector<1x8x128xf32>,
    %c7_i32 = arith.constant 7 : i32
    %c0_77 = arith.constant 0 : index
    %c0_78 = arith.constant 0 : index
    %101 = vector.load %arg6[%c0_77, %c0_78] : memref<8x128xf32, #tpu.memory_space<vmem>>, vector<8x128xf32>
    %102 = arith.truncf %101 : vector<8x128xf32> to vector<8x128xbf16>
    %103 = arith.index_cast %c7_i32 : i32 to index
    %c0_79 = arith.constant 0 : index
    %c0_80 = arith.constant 0 : index
    %104 = vector.load %arg2[%103, %c0_79, %c0_80] : memref<8x8x128xf32, #tpu.memory_space<vmem>>, vector<1x8x128xf32>
    %105 = vector.shape_cast %104 : vector<1x8x128xf32> to vector<8x128xf32>
    %c0_81 = arith.constant 0 : index
    %c0_82 = arith.constant 0 : index
    %106 = vector.load %arg4[%c0_81, %c0_82] : memref<128x128xbf16, #tpu.memory_space<vmem>>, vector<128x128xbf16>
    %cst_83 = arith.constant dense<0.000000e+00> : vector<8x128xf32>
    %107 = tpu.matmul %102, %106, %cst_83 {dimension_numbers = #tpu.dot_dimension_numbers<[1], [0], [0], [1], [0, 0, 1, 1], [], []>} : vector<8x128xbf16>, vector<128x128xbf16>, vector<8x128xf32> -> vector<8x128xf32>
    %108 = arith.addf %105, %107 : vector<8x128xf32>
    %109 = math.tanh %108 : vector<8x128xf32>
    %c0_84 = arith.constant 0 : index
    %c0_85 = arith.constant 0 : index
    %110 = vector.load %arg6[%c0_84, %c0_85] : memref<8x128xf32, #tpu.memory_space<vmem>>, vector<8x128xf32>
    tpu.vector_store %arg6[%c0_84, %c0_85], %109 {strides = array<i32>} : memref<8x128xf32, #tpu.memory_space<vmem>>, vector<8x128xf32>,
    %111 = arith.index_cast %c7_i32 : i32 to index
    %c0_86 = arith.constant 0 : index
    %c0_87 = arith.constant 0 : index
    %112 = vector.load %arg5[%111, %c0_86, %c0_87] : memref<8x8x128xf32, #tpu.memory_space<vmem>>, vector<1x8x128xf32>
    %113 = vector.shape_cast %112 : vector<1x8x128xf32> to vector<8x128xf32>
    %114 = vector.shape_cast %109 : vector<8x128xf32> to vector<1x8x128xf32>
    tpu.vector_store %arg5[%111, %c0_86, %c0_87], %114 {strides = array<i32>} : memref<8x8x128xf32, #tpu.memory_space<vmem>>, vector<1x8x128xf32>,
    %c8_i32 = arith.constant 8 : i32
    return
  }
  func.func @transform_0(%arg0: i32, %arg1: i32) -> (i32, i32, i32) {
    %c0_i32 = arith.constant 0 : i32
    %c0_i32_0 = arith.constant 0 : i32
    return %arg1, %arg0, %c0_i32 : i32, i32, i32
  }
  func.func @transform_1(%arg0: i32, %arg1: i32) -> (i32, i32) {
    %c0_i32 = arith.constant 0 : i32
    %c0_i32_0 = arith.constant 0 : i32
    return %arg0, %c0_i32 : i32, i32
  }
  func.func @transform_2(%arg0: i32, %arg1: i32) -> (i32, i32) {
    %c0_i32 = arith.constant 0 : i32
    %c0_i32_0 = arith.constant 0 : i32
    %c0_i32_1 = arith.constant 0 : i32
    return %c0_i32, %c0_i32_0 : i32, i32
  }
  func.func @transform_3(%arg0: i32, %arg1: i32) -> (i32, i32, i32) {
    %c0_i32 = arith.constant 0 : i32
    %c0_i32_0 = arith.constant 0 : i32
    return %arg1, %arg0, %c0_i32 : i32, i32, i32
  }
}

</mosaic_0001>

<llo_original>
// kernel: tpu_custom_call.1
$region0: #{tpu_custom_call.1}
  #allocation0 [shape = 'u32[]', space=smem, size = 0x4, offset = 0x4, fixed_abs, tag = 'smem constant byte address 0x4 - core index']
  #allocation1 [shape = 'u32[144,128]{1,0:T(1,128)}', space=vmem, size = 0x12000, scoped, tag = 'internal scratch']
  #allocation2 [shape = 'f32[8,128]{1,0:T(8,128)}', space=vmem, size = 0x1000, scoped, tag = 'scratch operand']
  %s0 = inlined_call_operand.hbm [shape: f32[8,8,128], index: 0, kind: input, shape index: {}]
  %s1 = inlined_call_operand.hbm [shape: f32[8,128], index: 1, kind: input, shape index: {}]
  %s2 = inlined_call_operand.hbm [shape: bf16[128,128], index: 2, kind: input, shape index: {}]
  %s3 = inlined_call_operand.hbm [shape: f32[8,8,128], index: 3, kind: output, shape index: {}]
  %s4 = sld [smem:[#allocation0]]
  $region38: #{tpu_custom_call.1} parent=0
    _
  %s6 = ssub.s32 1, %s4
  %s7 = scalar_select 0, %s6, %s4
  $region1: #{tpu_custom_call.1} parent=0
    #allocation3 [shape = 'u8[32768]{0}', space=vmem, size = 0x8000, scoped, tag = 'input window, operand 0, single buffered']
    #allocation4 [shape = 's32[1]{0}', space=sflag, size = 0x4, scoped, tag = 'scoped memory for tpu_custom_call.1']
    #allocation5 [shape = 's32[1]{0}', space=sflag, size = 0x4, scoped, tag = 'scoped memory for tpu_custom_call.1']
    #allocation6 [shape = 'u8[4096]{0}', space=vmem, size = 0x1000, scoped, tag = 'input window, operand 1, single buffered']
    #allocation7 [shape = 's32[1]{0}', space=sflag, size = 0x4, scoped, tag = 'scoped memory for tpu_custom_call.1']
    #allocation8 [shape = 'u8[32768]{0}', space=vmem, size = 0x8000, scoped, tag = 'input window, operand 2, single buffered']
    #allocation9 [shape = 'u8[32768]{0}', space=vmem, size = 0x8000, scoped, tag = 'output window, operand 0, single buffered']
    %8 = vsyncpa [#allocation4], 0
    %9 = vsyncpa [#allocation7], 0
    %10 = vsyncpa [#allocation5], 0
    // Predicated region
    $region2: #{tpu_custom_call.1} parent=1 // pred_check
      _
    $region3: #{tpu_custom_call.1} parent=1 // pred_check_branch
      %12 = sbr.rel (0) target = $region5
    $region4: #{tpu_custom_call.1} parent=1 // pred_region
      %s14 = ssub.s32 1024, 1024
      %15 = vsyncadd [#allocation4], %s14
      %s16 = sshll.u32 [#allocation3], 4
      %s17 = int_to_ptr.vmem [resolvable:$true] %s16
      %22 = dma.hbm_to_vmem [thread:$0]  %s0, 1024, %s17, [#allocation4], 128, 128, 8
    $region5: #{tpu_custom_call.1} parent=1 // pred_fallthru
      _
    // Predicated region
    $region6: #{tpu_custom_call.1} parent=1 // pred_check
      _
    $region7: #{tpu_custom_call.1} parent=1 // pred_check_branch
      %24 = sbr.rel (0) target = $region9
    $region8: #{tpu_custom_call.1} parent=1 // pred_region
      %s26 = ssub.s32 128, 128
      %27 = vsyncadd [#allocation7], %s26
      %s29 = sshll.u32 [#allocation6], 4
      %s30 = int_to_ptr.vmem [resolvable:$true] %s29
      %32 = dma.hbm_to_vmem [thread:$0]  %s1, 128, %s30, [#allocation7]
    $region9: #{tpu_custom_call.1} parent=1 // pred_fallthru
      _
    // Predicated region
    $region10: #{tpu_custom_call.1} parent=1 // pred_check
      _
    $region11: #{tpu_custom_call.1} parent=1 // pred_check_branch
      %34 = sbr.rel (0) target = $region13
    $region12: #{tpu_custom_call.1} parent=1 // pred_region
      %s36 = ssub.s32 1024, 1024
      %37 = vsyncadd [#allocation7], %s36
      %s38 = sshll.u32 [#allocation8], 4
      %s39 = int_to_ptr.vmem [resolvable:$true] %s38
      %44 = dma.hbm_to_vmem [thread:$0]  %s2, 1024, %s39, [#allocation7], 64, 64, 4
    $region13: #{tpu_custom_call.1} parent=1 // pred_fallthru
      _
    // Predicated region
    $region14: #{tpu_custom_call.1} parent=1 // pred_check
      _
    $region15: #{tpu_custom_call.1} parent=1 // pred_check_branch
      %46 = sbr.rel (0) target = $region17
    $region16: #{tpu_custom_call.1} parent=1 // pred_region
      %47 = dma.done [#allocation4], 1024
    $region17: #{tpu_custom_call.1} parent=1 // pred_fallthru
      _
    // Predicated region
    $region18: #{tpu_custom_call.1} parent=1 // pred_check
      _
    $region19: #{tpu_custom_call.1} parent=1 // pred_check_branch
      %49 = sbr.rel (0) target = $region21
    $region20: #{tpu_custom_call.1} parent=1 // pred_region
      %50 = dma.done [#allocation7], 128
    $region21: #{tpu_custom_call.1} parent=1 // pred_fallthru
      _
    // Predicated region
    $region22: #{tpu_custom_call.1} parent=1 // pred_check
      _
    $region23: #{tpu_custom_call.1} parent=1 // pred_check_branch
      %52 = sbr.rel (0) target = $region25
    $region24: #{tpu_custom_call.1} parent=1 // pred_region
      %53 = dma.done [#allocation7], 1024
    $region25: #{tpu_custom_call.1} parent=1 // pred_fallthru
      _
    %p55 = scmp.eq.s32.totalorder 0, 0
    // Predicated region
    $region26: #{tpu_custom_call.1} parent=1 // pred_check
      %p56 = pneg %p55
    $region27: #{tpu_custom_call.1} parent=1 // pred_check_branch
      %58 = sbr.rel (%p56) target = $region29
    $region28: #{tpu_custom_call.1} parent=1 // pred_region
      %v59 = vld [vmem:[#allocation6] sm:$0xff]
      %60 = vst [vmem:[#allocation2] sm:$0xff] %v59
    $region29: #{tpu_custom_call.1} parent=1 // pred_fallthru
      _
    %v61 = vld [vmem:[#allocation2] sm:$0xff]
    %v62 = vpack.c.bf16 %v61, %v61
    %v63 = vld [vmem:[#allocation3] sm:$0xff]
    %v64 = vld [vmem:[#allocation8] sm:$0xf]
    %v65 = vld [vmem:[#allocation8 + $0x4] sm:$0xf]
    %v66 = vld [vmem:[#allocation8 + $0x8] sm:$0xf]
    %v67 = vld [vmem:[#allocation8 + $0xc] sm:$0xf]
    %v68 = vld [vmem:[#allocation8 + $0x10] sm:$0xf]
    %v69 = vld [vmem:[#allocation8 + $0x14] sm:$0xf]
    %v70 = vld [vmem:[#allocation8 + $0x18] sm:$0xf]
    %v71 = vld [vmem:[#allocation8 + $0x1c] sm:$0xf]
    %v72 = vld [vmem:[#allocation8 + $0x20] sm:$0xf]
    %v73 = vld [vmem:[#allocation8 + $0x24] sm:$0xf]
    %v74 = vld [vmem:[#allocation8 + $0x28] sm:$0xf]
    %v75 = vld [vmem:[#allocation8 + $0x2c] sm:$0xf]
    %v76 = vld [vmem:[#allocation8 + $0x30] sm:$0xf]
    %v77 = vld [vmem:[#allocation8 + $0x34] sm:$0xf]
    %v78 = vld [vmem:[#allocation8 + $0x38] sm:$0xf]
    %v79 = vld [vmem:[#allocation8 + $0x3c] sm:$0xf]
    %v96 = vunpack.c.l.b16 %v64
    %v97 = vunpack.c.l.b16 %v65
    %v98 = vunpack.c.l.b16 %v66
    %v99 = vunpack.c.l.b16 %v67
    %v100 = vunpack.c.l.b16 %v68
    %v101 = vunpack.c.l.b16 %v69
    %v102 = vunpack.c.l.b16 %v70
    %v103 = vunpack.c.l.b16 %v71
    %v104 = vunpack.c.l.b16 %v72
    %v105 = vunpack.c.l.b16 %v73
    %v106 = vunpack.c.l.b16 %v74
    %v107 = vunpack.c.l.b16 %v75
    %v108 = vunpack.c.l.b16 %v76
    %v109 = vunpack.c.l.b16 %v77
    %v110 = vunpack.c.l.b16 %v78
    %v111 = vunpack.c.l.b16 %v79
    %v112 = vpack.c.b16 %v97, %v96
    %v113 = vpack.c.b16 %v99, %v98
    %v114 = vpack.c.b16 %v101, %v100
    %v115 = vpack.c.b16 %v103, %v102
    %v116 = vpack.c.b16 %v105, %v104
    %v117 = vpack.c.b16 %v107, %v106
    %v118 = vpack.c.b16 %v109, %v108
    %v119 = vpack.c.b16 %v111, %v110
    %128 = vmatprep.subr.bf16.mxu0 0
    %129 = vmatpush1.bf16.msra.mxu0 %v119
    %130 = vmatprep.subr.bf16.mxu0 0
    %131 = vmatpush1.bf16.msra.mxu0 %v118
    %132 = vmatprep.subr.bf16.mxu0 0
    %133 = vmatpush1.bf16.msra.mxu0 %v117
    %134 = vmatprep.subr.bf16.mxu0 0
    %135 = vmatpush1.bf16.msra.mxu0 %v116
    %136 = vmatprep.subr.bf16.mxu0 0
    %137 = vmatpush1.bf16.msra.mxu0 %v115
    %138 = vmatprep.subr.bf16.mxu0 0
    %139 = vmatpush1.bf16.msra.mxu0 %v114
    %140 = vmatprep.subr.bf16.mxu0 0
    %141 = vmatpush1.bf16.msra.mxu0 %v113
    %142 = vmatprep.subr.bf16.mxu0 0
    %143 = vmatpush1.bf16.msra.mxu0 %v112
    %144 = vmatprep.subr.bf16.mxu0 0
    %145 = vmatpush2.bf16.msra.mxu0 0
    %146 = vmatprep.subr.bf16.mxu0 0
    %147 = vmatpush2.bf16.msra.mxu0 0
    %148 = vmatprep.subr.bf16.mxu0 0
    %149 = vmatpush2.bf16.msra.mxu0 0
    %150 = vmatprep.subr.bf16.mxu0 0
    %151 = vmatpush2.bf16.msra.mxu0 0
    %152 = vmatprep.subr.bf16.mxu0 0
    %153 = vmatpush2.bf16.msra.mxu0 0
    %154 = vmatprep.subr.bf16.mxu0 0
    %155 = vmatpush2.bf16.msra.mxu0 0
    %156 = vmatprep.subr.bf16.mxu0 0
    %157 = vmatpush2.bf16.msra.mxu0 0
    %158 = vmatprep.subr.bf16.mxu0 0
    %159 = vmatpush2.bf16.msra.mxu0 0
    %160 = vmatprep.mubr.bf16.mxu0 0
    %161 = vmatmul.mubr.bf16.gmra.mxu0 %v62
    %v162 = vpop.f32.mrf.mxu0
    %v163 = vadd.f32 0.0, %v162
    %v164 = vpop.f32.mrf.mxu0
    %v165 = vpop.f32.mrf.mxu0
    %v166 = vpop.f32.mrf.mxu0
    %167 = vdwg.mxu0
    %v168 = vadd.f32 %v63, %v163
    %v169 = vtanh.pop %v168
    %170 = vst [vmem:[#allocation2] sm:$0xff] %v169
    %171 = vst [vmem:[#allocation9] sm:$0xff] %v169
    %v172 = vld [vmem:[#allocation2] sm:$0xff]
    %v173 = vpack.c.bf16 %v172, %v172
    %s174 = scalar_lea.vmem [#allocation3], 8
    %v175 = vld [vmem:[%s174] sm:$0xff]
    %v176 = vld [vmem:[#allocation8] sm:$0xf]
    %v177 = vld [vmem:[#allocation8 + $0x4] sm:$0xf]
    %v178 = vld [vmem:[#allocation8 + $0x8] sm:$0xf]
    %v179 = vld [vmem:[#allocation8 + $0xc] sm:$0xf]
    %v180 = vld [vmem:[#allocation8 + $0x10] sm:$0xf]
    %v181 = vld [vmem:[#allocation8 + $0x14] sm:$0xf]
    %v182 = vld [vmem:[#allocation8 + $0x18] sm:$0xf]
    %v183 = vld [vmem:[#allocation8 + $0x1c] sm:$0xf]
    %v184 = vld [vmem:[#allocation8 + $0x20] sm:$0xf]
    %v185 = vld [vmem:[#allocation8 + $0x24] sm:$0xf]
    %v186 = vld [vmem:[#allocation8 + $0x28] sm:$0xf]
    %v187 = vld [vmem:[#allocation8 + $0x2c] sm:$0xf]
    %v188 = vld [vmem:[#allocation8 + $0x30] sm:$0xf]
    %v189 = vld [vmem:[#allocation8 + $0x34] sm:$0xf]
    %v190 = vld [vmem:[#allocation8 + $0x38] sm:$0xf]
    %v191 = vld [vmem:[#allocation8 + $0x3c] sm:$0xf]
    %v208 = vunpack.c.l.b16 %v176
    %v209 = vunpack.c.l.b16 %v177
    %v210 = vunpack.c.l.b16 %v178
    %v211 = vunpack.c.l.b16 %v179
    %v212 = vunpack.c.l.b16 %v180
    %v213 = vunpack.c.l.b16 %v181
    %v214 = vunpack.c.l.b16 %v182
    %v215 = vunpack.c.l.b16 %v183
    %v216 = vunpack.c.l.b16 %v184
    %v217 = vunpack.c.l.b16 %v185
    %v218 = vunpack.c.l.b16 %v186
    %v219 = vunpack.c.l.b16 %v187
    %v220 = vunpack.c.l.b16 %v188
    %v221 = vunpack.c.l.b16 %v189
    %v222 = vunpack.c.l.b16 %v190
    %v223 = vunpack.c.l.b16 %v191
    %v224 = vpack.c.b16 %v209, %v208
    %v225 = vpack.c.b16 %v211, %v210
    %v226 = vpack.c.b16 %v213, %v212
    %v227 = vpack.c.b16 %v215, %v214
    %v228 = vpack.c.b16 %v217, %v216
    %v229 = vpack.c.b16 %v219, %v218
    %v230 = vpack.c.b16 %v221, %v220
    %v231 = vpack.c.b16 %v223, %v222
    %240 = vmatprep.subr.bf16.mxu0 0
    %241 = vmatpush1.bf16.msra.mxu0 %v231
    %242 = vmatprep.subr.bf16.mxu0 0
    %243 = vmatpush1.bf16.msra.mxu0 %v230
    %244 = vmatprep.subr.bf16.mxu0 0
    %245 = vmatpush1.bf16.msra.mxu0 %v229
    %246 = vmatprep.subr.bf16.mxu0 0
    %247 = vmatpush1.bf16.msra.mxu0 %v228
    %248 = vmatprep.subr.bf16.mxu0 0
    %249 = vmatpush1.bf16.msra.mxu0 %v227
    %250 = vmatprep.subr.bf16.mxu0 0
    %251 = vmatpush1.bf16.msra.mxu0 %v226
    %252 = vmatprep.subr.bf16.mxu0 0
    %253 = vmatpush1.bf16.msra.mxu0 %v225
    %254 = vmatprep.subr.bf16.mxu0 0
    %255 = vmatpush1.bf16.msra.mxu0 %v224
    %256 = vmatprep.subr.bf16.mxu0 0
    %257 = vmatpush2.bf16.msra.mxu0 0
    %258 = vmatprep.subr.bf16.mxu0 0
    %259 = vmatpush2.bf16.msra.mxu0 0
    %260 = vmatprep.subr.bf16.mxu0 0
    %261 = vmatpush2.bf16.msra.mxu0 0
    %262 = vmatprep.subr.bf16.mxu0 0
    %263 = vmatpush2.bf16.msra.mxu0 0
    %264 = vmatprep.subr.bf16.mxu0 0
    %265 = vmatpush2.bf16.msra.mxu0 0
    %266 = vmatprep.subr.bf16.mxu0 0
    %267 = vmatpush2.bf16.msra.mxu0 0
    %268 = vmatprep.subr.bf16.mxu0 0
    %269 = vmatpush2.bf16.msra.mxu0 0
    %270 = vmatprep.subr.bf16.mxu0 0
    %271 = vmatpush2.bf16.msra.mxu0 0
    %272 = vmatprep.mubr.bf16.mxu0 0
    %273 = vmatmul.mubr.bf16.gmra.mxu0 %v173
    %v274 = vpop.f32.mrf.mxu0
    %v275 = vadd.f32 0.0, %v274
    %v276 = vpop.f32.mrf.mxu0
    %v277 = vpop.f32.mrf.mxu0
    %v278 = vpop.f32.mrf.mxu0
    %279 = vdwg.mxu0
    %v280 = vadd.f32 %v175, %v275
    %v281 = vtanh.pop %v280
    %282 = vst [vmem:[#allocation2] sm:$0xff] %v281
    %s283 = scalar_lea.vmem [#allocation9], 8
    %284 = vst [vmem:[%s283] sm:$0xff] %v281
    %v285 = vld [vmem:[#allocation2] sm:$0xff]
    %v286 = vpack.c.bf16 %v285, %v285
    %s287 = scalar_lea.vmem [#allocation3], 16
    %v288 = vld [vmem:[%s287] sm:$0xff]
    %v289 = vld [vmem:[#allocation8] sm:$0xf]
    %v290 = vld [vmem:[#allocation8 + $0x4] sm:$0xf]
    %v291 = vld [vmem:[#allocation8 + $0x8] sm:$0xf]
    %v292 = vld [vmem:[#allocation8 + $0xc] sm:$0xf]
    %v293 = vld [vmem:[#allocation8 + $0x10] sm:$0xf]
    %v294 = vld [vmem:[#allocation8 + $0x14] sm:$0xf]
    %v295 = vld [vmem:[#allocation8 + $0x18] sm:$0xf]
    %v296 = vld [vmem:[#allocation8 + $0x1c] sm:$0xf]
    %v297 = vld [vmem:[#allocation8 + $0x20] sm:$0xf]
    %v298 = vld [vmem:[#allocation8 + $0x24] sm:$0xf]
    %v299 = vld [vmem:[#allocation8 + $0x28] sm:$0xf]
    %v300 = vld [vmem:[#allocation8 + $0x2c] sm:$0xf]
    %v301 = vld [vmem:[#allocation8 + $0x30] sm:$0xf]
    %v302 = vld [vmem:[#allocation8 + $0x34] sm:$0xf]
    %v303 = vld [vmem:[#allocation8 + $0x38] sm:$0xf]
    %v304 = vld [vmem:[#allocation8 + $0x3c] sm:$0xf]
    %v321 = vunpack.c.l.b16 %v289
    %v322 = vunpack.c.l.b16 %v290
    %v323 = vunpack.c.l.b16 %v291
    %v324 = vunpack.c.l.b16 %v292
    %v325 = vunpack.c.l.b16 %v293
    %v326 = vunpack.c.l.b16 %v294
    %v327 = vunpack.c.l.b16 %v295
    %v328 = vunpack.c.l.b16 %v296
    %v329 = vunpack.c.l.b16 %v297
    %v330 = vunpack.c.l.b16 %v298
    %v331 = vunpack.c.l.b16 %v299
    %v332 = vunpack.c.l.b16 %v300
    %v333 = vunpack.c.l.b16 %v301
    %v334 = vunpack.c.l.b16 %v302
    %v335 = vunpack.c.l.b16 %v303
    %v336 = vunpack.c.l.b16 %v304
    %v337 = vpack.c.b16 %v322, %v321
    %v338 = vpack.c.b16 %v324, %v323
    %v339 = vpack.c.b16 %v326, %v325
    %v340 = vpack.c.b16 %v328, %v327
    %v341 = vpack.c.b16 %v330, %v329
    %v342 = vpack.c.b16 %v332, %v331
    %v343 = vpack.c.b16 %v334, %v333
    %v344 = vpack.c.b16 %v336, %v335
    %353 = vmatprep.subr.bf16.mxu0 0
    %354 = vmatpush1.bf16.msra.mxu0 %v344
    %355 = vmatprep.subr.bf16.mxu0 0
    %356 = vmatpush1.bf16.msra.mxu0 %v343
    %357 = vmatprep.subr.bf16.mxu0 0
    %358 = vmatpush1.bf16.msra.mxu0 %v342
    %359 = vmatprep.subr.bf16.mxu0 0
    %360 = vmatpush1.bf16.msra.mxu0 %v341
    %361 = vmatprep.subr.bf16.mxu0 0
    %362 = vmatpush1.bf16.msra.mxu0 %v340
    %363 = vmatprep.subr.bf16.mxu0 0
    %364 = vmatpush1.bf16.msra.mxu0 %v339
    %365 = vmatprep.subr.bf16.mxu0 0
    %366 = vmatpush1.bf16.msra.mxu0 %v338
    %367 = vmatprep.subr.bf16.mxu0 0
    %368 = vmatpush1.bf16.msra.mxu0 %v337
    %369 = vmatprep.subr.bf16.mxu0 0
    %370 = vmatpush2.bf16.msra.mxu0 0
    %371 = vmatprep.subr.bf16.mxu0 0
    %372 = vmatpush2.bf16.msra.mxu0 0
    %373 = vmatprep.subr.bf16.mxu0 0
    %374 = vmatpush2.bf16.msra.mxu0 0
    %375 = vmatprep.subr.bf16.mxu0 0
    %376 = vmatpush2.bf16.msra.mxu0 0
    %377 = vmatprep.subr.bf16.mxu0 0
    %378 = vmatpush2.bf16.msra.mxu0 0
    %379 = vmatprep.subr.bf16.mxu0 0
    %380 = vmatpush2.bf16.msra.mxu0 0
    %381 = vmatprep.subr.bf16.mxu0 0
    %382 = vmatpush2.bf16.msra.mxu0 0
    %383 = vmatprep.subr.bf16.mxu0 0
    %384 = vmatpush2.bf16.msra.mxu0 0
    %385 = vmatprep.mubr.bf16.mxu0 0
    %386 = vmatmul.mubr.bf16.gmra.mxu0 %v286
    %v387 = vpop.f32.mrf.mxu0
    %v388 = vadd.f32 0.0, %v387
    %v389 = vpop.f32.mrf.mxu0
    %v390 = vpop.f32.mrf.mxu0
    %v391 = vpop.f32.mrf.mxu0
    %392 = vdwg.mxu0
    %v393 = vadd.f32 %v288, %v388
    %v394 = vtanh.pop %v393
    %395 = vst [vmem:[#allocation2] sm:$0xff] %v394
    %s396 = scalar_lea.vmem [#allocation9], 16
    %397 = vst [vmem:[%s396] sm:$0xff] %v394
    %v398 = vld [vmem:[#allocation2] sm:$0xff]
    %v399 = vpack.c.bf16 %v398, %v398
    %s400 = scalar_lea.vmem [#allocation3], 24
    %v401 = vld [vmem:[%s400] sm:$0xff]
    %v402 = vld [vmem:[#allocation8] sm:$0xf]
    %v403 = vld [vmem:[#allocation8 + $0x4] sm:$0xf]
    %v404 = vld [vmem:[#allocation8 + $0x8] sm:$0xf]
    %v405 = vld [vmem:[#allocation8 + $0xc] sm:$0xf]
    %v406 = vld [vmem:[#allocation8 + $0x10] sm:$0xf]
    %v407 = vld [vmem:[#allocation8 + $0x14] sm:$0xf]
    %v408 = vld [vmem:[#allocation8 + $0x18] sm:$0xf]
    %v409 = vld [vmem:[#allocation8 + $0x1c] sm:$0xf]
    %v410 = vld [vmem:[#allocation8 + $0x20] sm:$0xf]
    %v411 = vld [vmem:[#allocation8 + $0x24] sm:$0xf]
    %v412 = vld [vmem:[#allocation8 + $0x28] sm:$0xf]
    %v413 = vld [vmem:[#allocation8 + $0x2c] sm:$0xf]
    %v414 = vld [vmem:[#allocation8 + $0x30] sm:$0xf]
    %v415 = vld [vmem:[#allocation8 + $0x34] sm:$0xf]
    %v416 = vld [vmem:[#allocation8 + $0x38] sm:$0xf]
    %v417 = vld [vmem:[#allocation8 + $0x3c] sm:$0xf]
    %v434 = vunpack.c.l.b16 %v402
    %v435 = vunpack.c.l.b16 %v403
    %v436 = vunpack.c.l.b16 %v404
    %v437 = vunpack.c.l.b16 %v405
    %v438 = vunpack.c.l.b16 %v406
    %v439 = vunpack.c.l.b16 %v407
    %v440 = vunpack.c.l.b16 %v408
    %v441 = vunpack.c.l.b16 %v409
    %v442 = vunpack.c.l.b16 %v410
    %v443 = vunpack.c.l.b16 %v411
    %v444 = vunpack.c.l.b16 %v412
    %v445 = vunpack.c.l.b16 %v413
    %v446 = vunpack.c.l.b16 %v414
    %v447 = vunpack.c.l.b16 %v415
    %v448 = vunpack.c.l.b16 %v416
    %v449 = vunpack.c.l.b16 %v417
    %v450 = vpack.c.b16 %v435, %v434
    %v451 = vpack.c.b16 %v437, %v436
    %v452 = vpack.c.b16 %v439, %v438
    %v453 = vpack.c.b16 %v441, %v440
    %v454 = vpack.c.b16 %v443, %v442
    %v455 = vpack.c.b16 %v445, %v444
    %v456 = vpack.c.b16 %v447, %v446
    %v457 = vpack.c.b16 %v449, %v448
    %466 = vmatprep.subr.bf16.mxu0 0
    %467 = vmatpush1.bf16.msra.mxu0 %v457
    %468 = vmatprep.subr.bf16.mxu0 0
    %469 = vmatpush1.bf16.msra.mxu0 %v456
    %470 = vmatprep.subr.bf16.mxu0 0
    %471 = vmatpush1.bf16.msra.mxu0 %v455
    %472 = vmatprep.subr.bf16.mxu0 0
    %473 = vmatpush1.bf16.msra.mxu0 %v454
    %474 = vmatprep.subr.bf16.mxu0 0
    %475 = vmatpush1.bf16.msra.mxu0 %v453
    %476 = vmatprep.subr.bf16.mxu0 0
    %477 = vmatpush1.bf16.msra.mxu0 %v452
    %478 = vmatprep.subr.bf16.mxu0 0
    %479 = vmatpush1.bf16.msra.mxu0 %v451
    %480 = vmatprep.subr.bf16.mxu0 0
    %481 = vmatpush1.bf16.msra.mxu0 %v450
    %482 = vmatprep.subr.bf16.mxu0 0
    %483 = vmatpush2.bf16.msra.mxu0 0
    %484 = vmatprep.subr.bf16.mxu0 0
    %485 = vmatpush2.bf16.msra.mxu0 0
    %486 = vmatprep.subr.bf16.mxu0 0
    %487 = vmatpush2.bf16.msra.mxu0 0
    %488 = vmatprep.subr.bf16.mxu0 0
    %489 = vmatpush2.bf16.msra.mxu0 0
    %490 = vmatprep.subr.bf16.mxu0 0
    %491 = vmatpush2.bf16.msra.mxu0 0
    %492 = vmatprep.subr.bf16.mxu0 0
    %493 = vmatpush2.bf16.msra.mxu0 0
    %494 = vmatprep.subr.bf16.mxu0 0
    %495 = vmatpush2.bf16.msra.mxu0 0
    %496 = vmatprep.subr.bf16.mxu0 0
    %497 = vmatpush2.bf16.msra.mxu0 0
    %498 = vmatprep.mubr.bf16.mxu0 0
    %499 = vmatmul.mubr.bf16.gmra.mxu0 %v399
    %v500 = vpop.f32.mrf.mxu0
    %v501 = vadd.f32 0.0, %v500
    %v502 = vpop.f32.mrf.mxu0
    %v503 = vpop.f32.mrf.mxu0
    %v504 = vpop.f32.mrf.mxu0
    %505 = vdwg.mxu0
    %v506 = vadd.f32 %v401, %v501
    %v507 = vtanh.pop %v506
    %508 = vst [vmem:[#allocation2] sm:$0xff] %v507
    %s509 = scalar_lea.vmem [#allocation9], 24
    %510 = vst [vmem:[%s509] sm:$0xff] %v507
    %v511 = vld [vmem:[#allocation2] sm:$0xff]
    %v512 = vpack.c.bf16 %v511, %v511
    %s513 = scalar_lea.vmem [#allocation3], 32
    %v514 = vld [vmem:[%s513] sm:$0xff]
    %v515 = vld [vmem:[#allocation8] sm:$0xf]
    %v516 = vld [vmem:[#allocation8 + $0x4] sm:$0xf]
    %v517 = vld [vmem:[#allocation8 + $0x8] sm:$0xf]
    %v518 = vld [vmem:[#allocation8 + $0xc] sm:$0xf]
    %v519 = vld [vmem:[#allocation8 + $0x10] sm:$0xf]
    %v520 = vld [vmem:[#allocation8 + $0x14] sm:$0xf]
    %v521 = vld [vmem:[#allocation8 + $0x18] sm:$0xf]
    %v522 = vld [vmem:[#allocation8 + $0x1c] sm:$0xf]
    %v523 = vld [vmem:[#allocation8 + $0x20] sm:$0xf]
    %v524 = vld [vmem:[#allocation8 + $0x24] sm:$0xf]
    %v525 = vld [vmem:[#allocation8 + $0x28] sm:$0xf]
    %v526 = vld [vmem:[#allocation8 + $0x2c] sm:$0xf]
    %v527 = vld [vmem:[#allocation8 + $0x30] sm:$0xf]
    %v528 = vld [vmem:[#allocation8 + $0x34] sm:$0xf]
    %v529 = vld [vmem:[#allocation8 + $0x38] sm:$0xf]
    %v530 = vld [vmem:[#allocation8 + $0x3c] sm:$0xf]
    %v547 = vunpack.c.l.b16 %v515
    %v548 = vunpack.c.l.b16 %v516
    %v549 = vunpack.c.l.b16 %v517
    %v550 = vunpack.c.l.b16 %v518
    %v551 = vunpack.c.l.b16 %v519
    %v552 = vunpack.c.l.b16 %v520
    %v553 = vunpack.c.l.b16 %v521
    %v554 = vunpack.c.l.b16 %v522
    %v555 = vunpack.c.l.b16 %v523
    %v556 = vunpack.c.l.b16 %v524
    %v557 = vunpack.c.l.b16 %v525
    %v558 = vunpack.c.l.b16 %v526
    %v559 = vunpack.c.l.b16 %v527
    %v560 = vunpack.c.l.b16 %v528
    %v561 = vunpack.c.l.b16 %v529
    %v562 = vunpack.c.l.b16 %v530
    %v563 = vpack.c.b16 %v548, %v547
    %v564 = vpack.c.b16 %v550, %v549
    %v565 = vpack.c.b16 %v552, %v551
    %v566 = vpack.c.b16 %v554, %v553
    %v567 = vpack.c.b16 %v556, %v555
    %v568 = vpack.c.b16 %v558, %v557
    %v569 = vpack.c.b16 %v560, %v559
    %v570 = vpack.c.b16 %v562, %v561
    %579 = vmatprep.subr.bf16.mxu0 0
    %580 = vmatpush1.bf16.msra.mxu0 %v570
    %581 = vmatprep.subr.bf16.mxu0 0
    %582 = vmatpush1.bf16.msra.mxu0 %v569
    %583 = vmatprep.subr.bf16.mxu0 0
    %584 = vmatpush1.bf16.msra.mxu0 %v568
    %585 = vmatprep.subr.bf16.mxu0 0
    %586 = vmatpush1.bf16.msra.mxu0 %v567
    %587 = vmatprep.subr.bf16.mxu0 0
    %588 = vmatpush1.bf16.msra.mxu0 %v566
    %589 = vmatprep.subr.bf16.mxu0 0
    %590 = vmatpush1.bf16.msra.mxu0 %v565
    %591 = vmatprep.subr.bf16.mxu0 0
    %592 = vmatpush1.bf16.msra.mxu0 %v564
    %593 = vmatprep.subr.bf16.mxu0 0
    %594 = vmatpush1.bf16.msra.mxu0 %v563
    %595 = vmatprep.subr.bf16.mxu0 0
    %596 = vmatpush2.bf16.msra.mxu0 0
    %597 = vmatprep.subr.bf16.mxu0 0
    %598 = vmatpush2.bf16.msra.mxu0 0
    %599 = vmatprep.subr.bf16.mxu0 0
    %600 = vmatpush2.bf16.msra.mxu0 0
    %601 = vmatprep.subr.bf16.mxu0 0
    %602 = vmatpush2.bf16.msra.mxu0 0
    %603 = vmatprep.subr.bf16.mxu0 0
    %604 = vmatpush2.bf16.msra.mxu0 0
    %605 = vmatprep.subr.bf16.mxu0 0
    %606 = vmatpush2.bf16.msra.mxu0 0
    %607 = vmatprep.subr.bf16.mxu0 0
    %608 = vmatpush2.bf16.msra.mxu0 0
    %609 = vmatprep.subr.bf16.mxu0 0
    %610 = vmatpush2.bf16.msra.mxu0 0
    %611 = vmatprep.mubr.bf16.mxu0 0
    %612 = vmatmul.mubr.bf16.gmra.mxu0 %v512
    %v613 = vpop.f32.mrf.mxu0
    %v614 = vadd.f32 0.0, %v613
    %v615 = vpop.f32.mrf.mxu0
    %v616 = vpop.f32.mrf.mxu0
    %v617 = vpop.f32.mrf.mxu0
    %618 = vdwg.mxu0
    %v619 = vadd.f32 %v514, %v614
    %v620 = vtanh.pop %v619
    %621 = vst [vmem:[#allocation2] sm:$0xff] %v620
    %s622 = scalar_lea.vmem [#allocation9], 32
    %623 = vst [vmem:[%s622] sm:$0xff] %v620
    %v624 = vld [vmem:[#allocation2] sm:$0xff]
    %v625 = vpack.c.bf16 %v624, %v624
    %s626 = scalar_lea.vmem [#allocation3], 40
    %v627 = vld [vmem:[%s626] sm:$0xff]
    %v628 = vld [vmem:[#allocation8] sm:$0xf]
    %v629 = vld [vmem:[#allocation8 + $0x4] sm:$0xf]
    %v630 = vld [vmem:[#allocation8 + $0x8] sm:$0xf]
    %v631 = vld [vmem:[#allocation8 + $0xc] sm:$0xf]
    %v632 = vld [vmem:[#allocation8 + $0x10] sm:$0xf]
    %v633 = vld [vmem:[#allocation8 + $0x14] sm:$0xf]
    %v634 = vld [vmem:[#allocation8 + $0x18] sm:$0xf]
    %v635 = vld [vmem:[#allocation8 + $0x1c] sm:$0xf]
    %v636 = vld [vmem:[#allocation8 + $0x20] sm:$0xf]
    %v637 = vld [vmem:[#allocation8 + $0x24] sm:$0xf]
    %v638 = vld [vmem:[#allocation8 + $0x28] sm:$0xf]
    %v639 = vld [vmem:[#allocation8 + $0x2c] sm:$0xf]
    %v640 = vld [vmem:[#allocation8 + $0x30] sm:$0xf]
    %v641 = vld [vmem:[#allocation8 + $0x34] sm:$0xf]
    %v642 = vld [vmem:[#allocation8 + $0x38] sm:$0xf]
    %v643 = vld [vmem:[#allocation8 + $0x3c] sm:$0xf]
    %v660 = vunpack.c.l.b16 %v628
    %v661 = vunpack.c.l.b16 %v629
    %v662 = vunpack.c.l.b16 %v630
    %v663 = vunpack.c.l.b16 %v631
    %v664 = vunpack.c.l.b16 %v632
    %v665 = vunpack.c.l.b16 %v633
    %v666 = vunpack.c.l.b16 %v634
    %v667 = vunpack.c.l.b16 %v635
    %v668 = vunpack.c.l.b16 %v636
    %v669 = vunpack.c.l.b16 %v637
    %v670 = vunpack.c.l.b16 %v638
    %v671 = vunpack.c.l.b16 %v639
    %v672 = vunpack.c.l.b16 %v640
    %v673 = vunpack.c.l.b16 %v641
    %v674 = vunpack.c.l.b16 %v642
    %v675 = vunpack.c.l.b16 %v643
    %v676 = vpack.c.b16 %v661, %v660
    %v677 = vpack.c.b16 %v663, %v662
    %v678 = vpack.c.b16 %v665, %v664
    %v679 = vpack.c.b16 %v667, %v666
    %v680 = vpack.c.b16 %v669, %v668
    %v681 = vpack.c.b16 %v671, %v670
    %v682 = vpack.c.b16 %v673, %v672
    %v683 = vpack.c.b16 %v675, %v674
    %692 = vmatprep.subr.bf16.mxu0 0
    %693 = vmatpush1.bf16.msra.mxu0 %v683
    %694 = vmatprep.subr.bf16.mxu0 0
    %695 = vmatpush1.bf16.msra.mxu0 %v682
    %696 = vmatprep.subr.bf16.mxu0 0
    %697 = vmatpush1.bf16.msra.mxu0 %v681
    %698 = vmatprep.subr.bf16.mxu0 0
    %699 = vmatpush1.bf16.msra.mxu0 %v680
    %700 = vmatprep.subr.bf16.mxu0 0
    %701 = vmatpush1.bf16.msra.mxu0 %v679
    %702 = vmatprep.subr.bf16.mxu0 0
    %703 = vmatpush1.bf16.msra.mxu0 %v678
    %704 = vmatprep.subr.bf16.mxu0 0
    %705 = vmatpush1.bf16.msra.mxu0 %v677
    %706 = vmatprep.subr.bf16.mxu0 0
    %707 = vmatpush1.bf16.msra.mxu0 %v676
    %708 = vmatprep.subr.bf16.mxu0 0
    %709 = vmatpush2.bf16.msra.mxu0 0
    %710 = vmatprep.subr.bf16.mxu0 0
    %711 = vmatpush2.bf16.msra.mxu0 0
    %712 = vmatprep.subr.bf16.mxu0 0
    %713 = vmatpush2.bf16.msra.mxu0 0
    %714 = vmatprep.subr.bf16.mxu0 0
    %715 = vmatpush2.bf16.msra.mxu0 0
    %716 = vmatprep.subr.bf16.mxu0 0
    %717 = vmatpush2.bf16.msra.mxu0 0
    %718 = vmatprep.subr.bf16.mxu0 0
    %719 = vmatpush2.bf16.msra.mxu0 0
    %720 = vmatprep.subr.bf16.mxu0 0
    %721 = vmatpush2.bf16.msra.mxu0 0
    %722 = vmatprep.subr.bf16.mxu0 0
    %723 = vmatpush2.bf16.msra.mxu0 0
    %724 = vmatprep.mubr.bf16.mxu0 0
    %725 = vmatmul.mubr.bf16.gmra.mxu0 %v625
    %v726 = vpop.f32.mrf.mxu0
    %v727 = vadd.f32 0.0, %v726
    %v728 = vpop.f32.mrf.mxu0
    %v729 = vpop.f32.mrf.mxu0
    %v730 = vpop.f32.mrf.mxu0
    %731 = vdwg.mxu0
    %v732 = vadd.f32 %v627, %v727
    %v733 = vtanh.pop %v732
    %734 = vst [vmem:[#allocation2] sm:$0xff] %v733
    %s735 = scalar_lea.vmem [#allocation9], 40
    %736 = vst [vmem:[%s735] sm:$0xff] %v733
    %v737 = vld [vmem:[#allocation2] sm:$0xff]
    %v738 = vpack.c.bf16 %v737, %v737
    %s739 = scalar_lea.vmem [#allocation3], 48
    %v740 = vld [vmem:[%s739] sm:$0xff]
    %v741 = vld [vmem:[#allocation8] sm:$0xf]
    %v742 = vld [vmem:[#allocation8 + $0x4] sm:$0xf]
    %v743 = vld [vmem:[#allocation8 + $0x8] sm:$0xf]
    %v744 = vld [vmem:[#allocation8 + $0xc] sm:$0xf]
    %v745 = vld [vmem:[#allocation8 + $0x10] sm:$0xf]
    %v746 = vld [vmem:[#allocation8 + $0x14] sm:$0xf]
    %v747 = vld [vmem:[#allocation8 + $0x18] sm:$0xf]
    %v748 = vld [vmem:[#allocation8 + $0x1c] sm:$0xf]
    %v749 = vld [vmem:[#allocation8 + $0x20] sm:$0xf]
    %v750 = vld [vmem:[#allocation8 + $0x24] sm:$0xf]
    %v751 = vld [vmem:[#allocation8 + $0x28] sm:$0xf]
    %v752 = vld [vmem:[#allocation8 + $0x2c] sm:$0xf]
    %v753 = vld [vmem:[#allocation8 + $0x30] sm:$0xf]
    %v754 = vld [vmem:[#allocation8 + $0x34] sm:$0xf]
    %v755 = vld [vmem:[#allocation8 + $0x38] sm:$0xf]
    %v756 = vld [vmem:[#allocation8 + $0x3c] sm:$0xf]
    %v773 = vunpack.c.l.b16 %v741
    %v774 = vunpack.c.l.b16 %v742
    %v775 = vunpack.c.l.b16 %v743
    %v776 = vunpack.c.l.b16 %v744
    %v777 = vunpack.c.l.b16 %v745
    %v778 = vunpack.c.l.b16 %v746
    %v779 = vunpack.c.l.b16 %v747
    %v780 = vunpack.c.l.b16 %v748
    %v781 = vunpack.c.l.b16 %v749
    %v782 = vunpack.c.l.b16 %v750
    %v783 = vunpack.c.l.b16 %v751
    %v784 = vunpack.c.l.b16 %v752
    %v785 = vunpack.c.l.b16 %v753
    %v786 = vunpack.c.l.b16 %v754
    %v787 = vunpack.c.l.b16 %v755
    %v788 = vunpack.c.l.b16 %v756
    %v789 = vpack.c.b16 %v774, %v773
    %v790 = vpack.c.b16 %v776, %v775
    %v791 = vpack.c.b16 %v778, %v777
    %v792 = vpack.c.b16 %v780, %v779
    %v793 = vpack.c.b16 %v782, %v781
    %v794 = vpack.c.b16 %v784, %v783
    %v795 = vpack.c.b16 %v786, %v785
    %v796 = vpack.c.b16 %v788, %v787
    %805 = vmatprep.subr.bf16.mxu0 0
    %806 = vmatpush1.bf16.msra.mxu0 %v796
    %807 = vmatprep.subr.bf16.mxu0 0
    %808 = vmatpush1.bf16.msra.mxu0 %v795
    %809 = vmatprep.subr.bf16.mxu0 0
    %810 = vmatpush1.bf16.msra.mxu0 %v794
    %811 = vmatprep.subr.bf16.mxu0 0
    %812 = vmatpush1.bf16.msra.mxu0 %v793
    %813 = vmatprep.subr.bf16.mxu0 0
    %814 = vmatpush1.bf16.msra.mxu0 %v792
    %815 = vmatprep.subr.bf16.mxu0 0
    %816 = vmatpush1.bf16.msra.mxu0 %v791
    %817 = vmatprep.subr.bf16.mxu0 0
    %818 = vmatpush1.bf16.msra.mxu0 %v790
    %819 = vmatprep.subr.bf16.mxu0 0
    %820 = vmatpush1.bf16.msra.mxu0 %v789
    %821 = vmatprep.subr.bf16.mxu0 0
    %822 = vmatpush2.bf16.msra.mxu0 0
    %823 = vmatprep.subr.bf16.mxu0 0
    %824 = vmatpush2.bf16.msra.mxu0 0
    %825 = vmatprep.subr.bf16.mxu0 0
    %826 = vmatpush2.bf16.msra.mxu0 0
    %827 = vmatprep.subr.bf16.mxu0 0
    %828 = vmatpush2.bf16.msra.mxu0 0
    %829 = vmatprep.subr.bf16.mxu0 0
    %830 = vmatpush2.bf16.msra.mxu0 0
    %831 = vmatprep.subr.bf16.mxu0 0
    %832 = vmatpush2.bf16.msra.mxu0 0
    %833 = vmatprep.subr.bf16.mxu0 0
    %834 = vmatpush2.bf16.msra.mxu0 0
    %835 = vmatprep.subr.bf16.mxu0 0
    %836 = vmatpush2.bf16.msra.mxu0 0
    %837 = vmatprep.mubr.bf16.mxu0 0
    %838 = vmatmul.mubr.bf16.gmra.mxu0 %v738
    %v839 = vpop.f32.mrf.mxu0
    %v840 = vadd.f32 0.0, %v839
    %v841 = vpop.f32.mrf.mxu0
    %v842 = vpop.f32.mrf.mxu0
    %v843 = vpop.f32.mrf.mxu0
    %844 = vdwg.mxu0
    %v845 = vadd.f32 %v740, %v840
    %v846 = vtanh.pop %v845
    %847 = vst [vmem:[#allocation2] sm:$0xff] %v846
    %s848 = scalar_lea.vmem [#allocation9], 48
    %849 = vst [vmem:[%s848] sm:$0xff] %v846
    %v850 = vld [vmem:[#allocation2] sm:$0xff]
    %v851 = vpack.c.bf16 %v850, %v850
    %s852 = scalar_lea.vmem [#allocation3], 56
    %v853 = vld [vmem:[%s852] sm:$0xff]
    %v854 = vld [vmem:[#allocation8] sm:$0xf]
    %v855 = vld [vmem:[#allocation8 + $0x4] sm:$0xf]
    %v856 = vld [vmem:[#allocation8 + $0x8] sm:$0xf]
    %v857 = vld [vmem:[#allocation8 + $0xc] sm:$0xf]
    %v858 = vld [vmem:[#allocation8 + $0x10] sm:$0xf]
    %v859 = vld [vmem:[#allocation8 + $0x14] sm:$0xf]
    %v860 = vld [vmem:[#allocation8 + $0x18] sm:$0xf]
    %v861 = vld [vmem:[#allocation8 + $0x1c] sm:$0xf]
    %v862 = vld [vmem:[#allocation8 + $0x20] sm:$0xf]
    %v863 = vld [vmem:[#allocation8 + $0x24] sm:$0xf]
    %v864 = vld [vmem:[#allocation8 + $0x28] sm:$0xf]
    %v865 = vld [vmem:[#allocation8 + $0x2c] sm:$0xf]
    %v866 = vld [vmem:[#allocation8 + $0x30] sm:$0xf]
    %v867 = vld [vmem:[#allocation8 + $0x34] sm:$0xf]
    %v868 = vld [vmem:[#allocation8 + $0x38] sm:$0xf]
    %v869 = vld [vmem:[#allocation8 + $0x3c] sm:$0xf]
    %v886 = vunpack.c.l.b16 %v854
    %v887 = vunpack.c.l.b16 %v855
    %v888 = vunpack.c.l.b16 %v856
    %v889 = vunpack.c.l.b16 %v857
    %v890 = vunpack.c.l.b16 %v858
    %v891 = vunpack.c.l.b16 %v859
    %v892 = vunpack.c.l.b16 %v860
    %v893 = vunpack.c.l.b16 %v861
    %v894 = vunpack.c.l.b16 %v862
    %v895 = vunpack.c.l.b16 %v863
    %v896 = vunpack.c.l.b16 %v864
    %v897 = vunpack.c.l.b16 %v865
    %v898 = vunpack.c.l.b16 %v866
    %v899 = vunpack.c.l.b16 %v867
    %v900 = vunpack.c.l.b16 %v868
    %v901 = vunpack.c.l.b16 %v869
    %v902 = vpack.c.b16 %v887, %v886
    %v903 = vpack.c.b16 %v889, %v888
    %v904 = vpack.c.b16 %v891, %v890
    %v905 = vpack.c.b16 %v893, %v892
    %v906 = vpack.c.b16 %v895, %v894
    %v907 = vpack.c.b16 %v897, %v896
    %v908 = vpack.c.b16 %v899, %v898
    %v909 = vpack.c.b16 %v901, %v900
    %918 = vmatprep.subr.bf16.mxu0 0
    %919 = vmatpush1.bf16.msra.mxu0 %v909
    %920 = vmatprep.subr.bf16.mxu0 0
    %921 = vmatpush1.bf16.msra.mxu0 %v908
    %922 = vmatprep.subr.bf16.mxu0 0
    %923 = vmatpush1.bf16.msra.mxu0 %v907
    %924 = vmatprep.subr.bf16.mxu0 0
    %925 = vmatpush1.bf16.msra.mxu0 %v906
    %926 = vmatprep.subr.bf16.mxu0 0
    %927 = vmatpush1.bf16.msra.mxu0 %v905
    %928 = vmatprep.subr.bf16.mxu0 0
    %929 = vmatpush1.bf16.msra.mxu0 %v904
    %930 = vmatprep.subr.bf16.mxu0 0
    %931 = vmatpush1.bf16.msra.mxu0 %v903
    %932 = vmatprep.subr.bf16.mxu0 0
    %933 = vmatpush1.bf16.msra.mxu0 %v902
    %934 = vmatprep.subr.bf16.mxu0 0
    %935 = vmatpush2.bf16.msra.mxu0 0
    %936 = vmatprep.subr.bf16.mxu0 0
    %937 = vmatpush2.bf16.msra.mxu0 0
    %938 = vmatprep.subr.bf16.mxu0 0
    %939 = vmatpush2.bf16.msra.mxu0 0
    %940 = vmatprep.subr.bf16.mxu0 0
    %941 = vmatpush2.bf16.msra.mxu0 0
    %942 = vmatprep.subr.bf16.mxu0 0
    %943 = vmatpush2.bf16.msra.mxu0 0
    %944 = vmatprep.subr.bf16.mxu0 0
    %945 = vmatpush2.bf16.msra.mxu0 0
    %946 = vmatprep.subr.bf16.mxu0 0
    %947 = vmatpush2.bf16.msra.mxu0 0
    %948 = vmatprep.subr.bf16.mxu0 0
    %949 = vmatpush2.bf16.msra.mxu0 0
    %950 = vmatprep.mubr.bf16.mxu0 0
    %951 = vmatmul.mubr.bf16.gmra.mxu0 %v851
    %v952 = vpop.f32.mrf.mxu0
    %v953 = vadd.f32 0.0, %v952
    %v954 = vpop.f32.mrf.mxu0
    %v955 = vpop.f32.mrf.mxu0
    %v956 = vpop.f32.mrf.mxu0
    %957 = vdwg.mxu0
    %v958 = vadd.f32 %v853, %v953
    %v959 = vtanh.pop %v958
    %960 = vst [vmem:[#allocation2] sm:$0xff] %v959
    %s961 = scalar_lea.vmem [#allocation9], 56
    %962 = vst [vmem:[%s961] sm:$0xff] %v959
    // Predicated region
    $region30: #{tpu_custom_call.1} parent=1 // pred_check
      _
    $region31: #{tpu_custom_call.1} parent=1 // pred_check_branch
      %964 = sbr.rel (0) target = $region33
    $region32: #{tpu_custom_call.1} parent=1 // pred_region
      %s966 = ssub.s32 1024, 1024
      %967 = vsyncadd [#allocation5], %s966
      %s968 = sshll.u32 [#allocation9], 4
      %s969 = int_to_ptr.vmem [resolvable:$true] %s968
      %974 = dma.vmem_to_hbm [thread:$0]  %s969, 1024, %s3, [#allocation5], 128, 128, 8
    $region33: #{tpu_custom_call.1} parent=1 // pred_fallthru
      _
    // Predicated region
    $region34: #{tpu_custom_call.1} parent=1 // pred_check
      _
    $region35: #{tpu_custom_call.1} parent=1 // pred_check_branch
      %976 = sbr.rel (0) target = $region37
    $region36: #{tpu_custom_call.1} parent=1 // pred_region
      %977 = dma.done [#allocation5], 1024
    $region37: #{tpu_custom_call.1} parent=1 // pred_fallthru
      _
    %978 = vsyncpa [#allocation4], 1
    %979 = vsyncpa [#allocation7], 1
    %980 = vsyncpa [#allocation5], 1

</llo_original>
